<compile_context>
chip_gen: v6e
topology: v6e:2x2x1
jax: 0.10.0
libtpu: 0.0.40
codegen_flags: <defaults>
</compile_context>

<pallas_src>
import functools

import jax
import jax.numpy as jnp
from jax import lax
from jax.experimental import pallas as pl
from jax.experimental.pallas import tpu as pltpu

_LANE = 128
_SUBLANE = 8


def _round_up(x, m):
    return (x + m - 1) // m * m


def _vmem_caps():
    """Chip-aware (vmem_limit_bytes, tile budget) with headroom for scratch."""
    try:
        cap = int(pltpu.get_tpu_info().vmem_capacity_bytes)
    except Exception:
        cap = 64 * 1024 * 1024          # conservative default (v7x: 64 MiB / TC)
    limit = max(32, cap // (1024 * 1024) - 16) * 1024 * 1024   # leave headroom
    limit = min(limit, 112 * 1024 * 1024)
    budget = limit - 12 * 1024 * 1024   # room for compiler scratch / semaphores
    return limit, budget


def _num_tensorcores():
    """2 on v7x-style megacore parts, else 1 (v5e/v6e/CPU fallback)."""
    try:
        kind = jax.devices()[0].device_kind.lower()
    except Exception:
        return 1
    return 2 if "v7" in kind else 1


def _choose_tiles(n, d, c, budget, training, cores):
    """Pick (tm, tk): row tile and feature (reduction) tile under the budget."""
    n8 = _round_up(max(n, _SUBLANE), _SUBLANE)

    def max_tm(tk):
        fixed = 2 * tk * c * 4 + 2 * c * 4              # W (dbl-buffered) + bias
        per_row = 2 * tk * 4 + 3 * c * 4                # x dbl-buf, out dbl-buf + acc
        if training:
            per_row += 3 * tk * 4                       # hash / iota / mask temporaries
        return max(0, (budget - fixed) // per_row)

    # First try: keep the whole feature dim resident (single reduction step).
    tk = d
    tm = max_tm(tk)
    if tm < 256 and d > 512:
        # Feature dim too wide: K-tile it so the row tile stays in the
        # 512-1024-row sweet spot instead of collapsing to a few rows.
        tk = 512                                        # multiple of 128
        while tk * 2 <= d and max_tm(tk * 2) >= 512:
            tk *= 2
        tm = max_tm(tk)

    tm = max(_SUBLANE, min(int(tm), 1024, n8))
    tm = (tm // _SUBLANE) * _SUBLANE

    # Megacore (2-TC) parts: keep the number of row tiles even so both cores
    # get equal work.  Single-TC chips keep fits-in-one-tile problems whole.
    if cores >= 2 and n > _SUBLANE:
        nt = -(-n // tm)
        if nt % 2 == 1:
            nt += 1
            tm = max(_SUBLANE, _round_up(-(-n // nt), _SUBLANE))
    return tm, tk


def _fmix32(h):
    """murmur3 finalizer on uint32 lanes (pure VPU work, backend-agnostic)."""
    h = h ^ (h >> 16)
    h = h * jnp.uint32(0x85EBCA6B)
    h = h ^ (h >> 13)
    h = h * jnp.uint32(0xC2B2AE35)
    h = h ^ (h >> 16)
    return h


def _sgc_kernel(seed_ref, x_ref, w_ref, b_ref, o_ref, acc_ref, *,
                p, apply_dropout, d_total, tk):
    # x_ref: (tm, tk)  w_ref: (tk, C)  b_ref: (1, C)  o_ref/acc_ref: (tm, C)
    k = pl.program_id(1)
    nk = pl.num_programs(1)

    @pl.when(k == 0)
    def _():
        acc_ref[...] = jnp.zeros_like(acc_ref)

    x = x_ref[...]

    # Zero feature columns past D on the (possibly partial) last K block so
    # out-of-bounds garbage never contributes to the reduction.  (The matching
    # rows of W are zero-padded host-side, so both factors are finite zeros.)
    rem = d_total % tk
    if rem:
        col_in_blk = lax.broadcasted_iota(jnp.int32, x.shape, 1)
        valid = jnp.logical_or(k < nk - 1, col_in_blk < rem)
        x = jnp.where(valid, x, jnp.zeros_like(x))

    if apply_dropout:
        # Counter-based hash PRNG keyed on (seed, global row, global col):
        # deterministic, tile-size independent, no TPU-only prng primitives.
        tm_blk = x.shape[0]
        row = pl.program_id(0) * tm_blk + lax.broadcasted_iota(jnp.int32, x.shape, 0)
        col = k * tk + lax.broadcasted_iota(jnp.int32, x.shape, 1)
        idx = row * jnp.int32(d_total) + col + seed_ref[0] * jnp.int32(0x27D4EB2F)
        h = _fmix32(idx.astype(jnp.uint32))
        # Uniform in [0, 1) from the top 24 bits; keep with prob 1 - p
        # (quantized to 2^-24 — negligible bias).
        u = (h >> 8).astype(jnp.int32).astype(jnp.float32) * jnp.float32(1.0 / 16777216.0)
        x = jnp.where(u >= jnp.float32(p), x, jnp.zeros_like(x))

    acc_ref[...] += jnp.dot(x, w_ref[...], preferred_element_type=jnp.float32)

    @pl.when(k == nk - 1)
    def _():
        r = acc_ref[...]
        if apply_dropout:
            # 1/(1-p) applied after the (linear) matmul on the small [tm, C] tile.
            r = r * jnp.float32(1.0 / (1.0 - p))
        o_ref[...] = (r + b_ref[...]).astype(o_ref.dtype)


def sgc_forward(x, weight_t, bias, *, dropout_p=0.0, training=False, seed=0,
                tm=None, tk=None):
    """SGCModel.forward: Linear(Dropout(p)(x)) = Dropout(p)(x) @ W.T + b.

    x:        [N, D] float32 (already A_hat^K-propagated upstream)
    weight_t: [D, C] float32 (torch Linear weight, transposed)
    bias:     [C]    float32
    Returns:  [N, C] float32
    """
    N, D = x.shape
    C = weight_t.shape[1]
    p = float(dropout_p)
    apply_dropout = bool(training) and p > 0.0

    if apply_dropout and p >= 1.0:
        # Dropout(p=1) zeroes the input, so the linear layer returns the bias.
        return jnp.broadcast_to(bias.astype(x.dtype)[None, :], (N, C))

    vmem_limit, budget = _vmem_caps()
    cores = _num_tensorcores()
    auto_tm, auto_tk = _choose_tiles(N, D, C, budget, apply_dropout, cores)
    tm = auto_tm if tm is None else max(_SUBLANE, (int(tm) // _SUBLANE) * _SUBLANE)
    tk = auto_tk if tk is None else int(tk)

    n_rows = pl.cdiv(N, tm)   # non-divisible edge blocks handled by Pallas:
    n_k = pl.cdiv(D, tk)      # no wrapper-side jnp.pad copy of the x stream.

    # Zero-pad the (small) weight along the reduction dim so every K block of W
    # is finite; the matching out-of-bounds x columns are zeroed in-kernel.
    D_pad = n_k * tk
    w_p = weight_t if D_pad == D else jnp.pad(weight_t, ((0, D_pad - D), (0, 0)))
    b2d = bias.reshape(1, C)
    seed_arr = jnp.asarray([seed], dtype=jnp.int32)

    kernel = functools.partial(_sgc_kernel, p=p, apply_dropout=apply_dropout,
                               d_total=D, tk=tk)

    grid_spec = pltpu.PrefetchScalarGridSpec(
        num_scalar_prefetch=1,
        grid=(n_rows, n_k),
        in_specs=[
            pl.BlockSpec((tm, tk), lambda i, k, s: (i, k)),   # x row/K tile
            pl.BlockSpec((tk, C), lambda i, k, s: (k, 0)),    # W K tile
            pl.BlockSpec((1, C), lambda i, k, s: (0, 0)),     # bias (resident)
        ],
        out_specs=pl.BlockSpec((tm, C), lambda i, k, s: (i, 0)),
        scratch_shapes=[pltpu.VMEM((tm, C), jnp.float32)],    # f32 accumulator
    )

    cost = pl.CostEstimate(
        flops=2 * N * D * C,
        transcendentals=0,
        bytes_accessed=4 * (N * D + D_pad * C + N * C + C),
    )

    out = pl.pallas_call(
        kernel,
        out_shape=jax.ShapeDtypeStruct((N, C), x.dtype),
        grid_spec=grid_spec,
        compiler_params=pltpu.CompilerParams(
            dimension_semantics=("parallel", "arbitrary"),
            vmem_limit_bytes=vmem_limit,
        ),
        cost_estimate=cost,
    )(seed_arr, x, w_p, b2d)
    return out


def init_sgc_params(key, input_dim, num_classes):
    """Deterministic init mimicking torch.nn.Linear default (+/- 1/sqrt(fan_in))."""
    kw, kb = jax.random.split(key)
    bound = 1.0 / (input_dim ** 0.5)
    # torch stores weight as [C, D]; we keep its transpose [D, C] for the kernel.
    weight_t = jax.random.uniform(kw, (input_dim, num_classes), jnp.float32,
                                  minval=-bound, maxval=bound)
    bias = jax.random.uniform(kb, (num_classes,), jnp.float32,
                              minval=-bound, maxval=bound)
    return weight_t, bias


if __name__ == "__main__":
    # Small SGC-like shapes: 200 nodes (non-multiple of typical tiles,
    # exercises edge-block handling), 128 input features, 8 classes.
    N, D, C = 200, 128, 8

    key = jax.random.PRNGKey(0)
    kx, kp = jax.random.split(key)
    x = jax.random.normal(kx, (N, D), dtype=jnp.float32)
    weight_t, bias = init_sgc_params(kp, D, C)

    # Eval mode (dropout == identity, matches SGCModel default --dropout 0).
    out = sgc_forward(x, weight_t, bias, dropout_p=0.0, training=False)
    out = jax.block_until_ready(out)
    ref = x @ weight_t + bias[None, :]
    assert out.shape == (N, C)
    assert jnp.allclose(out, ref, atol=1e-4, rtol=1e-4)

    # Training-mode dropout smoke test (hash-based mask; check shape/finiteness
    # and that it stays within the no-dropout / double-scale envelope).
    out_tr = sgc_forward(x, weight_t, bias, dropout_p=0.5, training=True, seed=7)
    out_tr = jax.block_until_ready(out_tr)
    assert out_tr.shape == (N, C)
    assert bool(jnp.all(jnp.isfinite(out_tr)))

    # TODO(synk): K-step propagation (A_hat^K @ X) happens in
    # SGCLayer.preprocess_features outside the model forward, so it is not
    # part of this kernel.
    print("KERNEL_OK")
</pallas_src>

<mosaic_0001>
module attributes {stable_mosaic.version = 11 : i64} {
  func.func @_sgc_kernel(%arg0: i32, %arg1: i32, %arg2: memref<1xi32, #tpu.memory_space<smem>>, %arg3: memref<200x128xf32, #tpu.memory_space<vmem>>, %arg4: memref<128x8xf32, #tpu.memory_space<vmem>>, %arg5: memref<1x8xf32, #tpu.memory_space<vmem>>, %arg6: memref<200x8xf32, #tpu.memory_space<vmem>>, %arg7: memref<200x8xf32, #tpu.memory_space<vmem>>) attributes {dimension_semantics = [#tpu.dimension_semantics<parallel>, #tpu.dimension_semantics<arbitrary>], iteration_bounds = array<i64: 1, 1>, scalar_prefetch = 1 : i64, scratch_operands = 1 : i64, tpu.core_type = #tpu.core_type<tc>, window_params = [{transform_indices = @transform_0, window_bounds = array<i64: 200, 128>}, {transform_indices = @transform_1, window_bounds = array<i64: 128, 8>}, {pipeline_mode = #tpu.pipeline_mode<synchronous>, transform_indices = @transform_2, window_bounds = array<i64: 1, 8>}, {transform_indices = @transform_3, window_bounds = array<i64: 200, 8>}]} {
    %c0_i32 = arith.constant 0 : i32
    %0 = arith.cmpi eq, %arg1, %c0_i32 : i32
    %1 = arith.extui %0 : i1 to i32
    %c0_i32_0 = arith.constant 0 : i32
    %2 = arith.cmpi ne, %1, %c0_i32_0 : i32
    scf.if %2 {
      %cst_10 = arith.constant 0.000000e+00 : f32
      %12 = vector.broadcast %cst_10 : f32 to vector<200x8xf32>
      %c0_11 = arith.constant 0 : index
      %c0_12 = arith.constant 0 : index
      %13 = vector.load %arg7[%c0_11, %c0_12] : memref<200x8xf32, #tpu.memory_space<vmem>>, vector<200x8xf32>
      tpu.vector_store %arg7[%c0_11, %c0_12], %12 {strides = array<i32>} : memref<200x8xf32, #tpu.memory_space<vmem>>, vector<200x8xf32>,
    } else {
    }
    %c0 = arith.constant 0 : index
    %c0_1 = arith.constant 0 : index
    %3 = vector.load %arg3[%c0, %c0_1] : memref<200x128xf32, #tpu.memory_space<vmem>>, vector<200x128xf32>
    %c0_2 = arith.constant 0 : index
    %c0_3 = arith.constant 0 : index
    %4 = vector.load %arg7[%c0_2, %c0_3] : memref<200x8xf32, #tpu.memory_space<vmem>>, vector<200x8xf32>
    %c0_4 = arith.constant 0 : index
    %c0_5 = arith.constant 0 : index
    %5 = vector.load %arg4[%c0_4, %c0_5] : memref<128x8xf32, #tpu.memory_space<vmem>>, vector<128x8xf32>
    %cst = arith.constant dense<0.000000e+00> : vector<200x8xf32>
    %6 = tpu.matmul %3, %5, %cst {dimension_numbers = #tpu.dot_dimension_numbers<[1], [0], [0], [1], [0, 0, 1, 1], [], []>} : vector<200x128xf32>, vector<128x8xf32>, vector<200x8xf32> -> vector<200x8xf32>
    %7 = arith.addf %4, %6 : vector<200x8xf32>
    %c0_6 = arith.constant 0 : index
    %c0_7 = arith.constant 0 : index
    %8 = vector.load %arg7[%c0_6, %c0_7] : memref<200x8xf32, #tpu.memory_space<vmem>>, vector<200x8xf32>
    tpu.vector_store %arg7[%c0_6, %c0_7], %7 {strides = array<i32>} : memref<200x8xf32, #tpu.memory_space<vmem>>, vector<200x8xf32>,
    %c0_i32_8 = arith.constant 0 : i32
    %9 = arith.cmpi eq, %arg1, %c0_i32_8 : i32
    %10 = arith.extui %9 : i1 to i32
    %c0_i32_9 = arith.constant 0 : i32
    %11 = arith.cmpi ne, %10, %c0_i32_9 : i32
    scf.if %11 {
      %c0_10 = arith.constant 0 : index
      %c0_11 = arith.constant 0 : index
      %12 = vector.load %arg7[%c0_10, %c0_11] : memref<200x8xf32, #tpu.memory_space<vmem>>, vector<200x8xf32>
      %c0_12 = arith.constant 0 : index
      %c0_13 = arith.constant 0 : index
      %13 = vector.load %arg5[%c0_12, %c0_13] : memref<1x8xf32, #tpu.memory_space<vmem>>, vector<1x8xf32>
      %14 = vector.broadcast %13 : vector<1x8xf32> to vector<200x8xf32>
      %15 = arith.addf %12, %14 : vector<200x8xf32>
      %c0_14 = arith.constant 0 : index
      %c0_15 = arith.constant 0 : index
      %16 = vector.load %arg6[%c0_14, %c0_15] : memref<200x8xf32, #tpu.memory_space<vmem>>, vector<200x8xf32>
      tpu.vector_store %arg6[%c0_14, %c0_15], %15 {strides = array<i32>} : memref<200x8xf32, #tpu.memory_space<vmem>>, vector<200x8xf32>,
    } else {
    }
    return
  }
  func.func @transform_0(%arg0: i32, %arg1: i32, %arg2: memref<1xi32, #tpu.memory_space<smem>>) -> (i32, i32) {
    %c0_i32 = arith.constant 0 : i32
    return %arg0, %arg1 : i32, i32
  }
  func.func @transform_1(%arg0: i32, %arg1: i32, %arg2: memref<1xi32, #tpu.memory_space<smem>>) -> (i32, i32) {
    %c0_i32 = arith.constant 0 : i32
    %c0_i32_0 = arith.constant 0 : i32
    return %arg1, %c0_i32 : i32, i32
  }
  func.func @transform_2(%arg0: i32, %arg1: i32, %arg2: memref<1xi32, #tpu.memory_space<smem>>) -> (i32, i32) {
    %c0_i32 = arith.constant 0 : i32
    %c0_i32_0 = arith.constant 0 : i32
    %c0_i32_1 = arith.constant 0 : i32
    return %c0_i32, %c0_i32_0 : i32, i32
  }
  func.func @transform_3(%arg0: i32, %arg1: i32, %arg2: memref<1xi32, #tpu.memory_space<smem>>) -> (i32, i32) {
    %c0_i32 = arith.constant 0 : i32
    %c0_i32_0 = arith.constant 0 : i32
    return %arg0, %c0_i32 : i32, i32
  }
}

</mosaic_0001>

<llo_original>
// kernel: tpu_custom_call.1
$region0: #{tpu_custom_call.1}
  #allocation0 [shape = 'u32[]', space=smem, size = 0x4, offset = 0x4, fixed_abs, tag = 'smem constant byte address 0x4 - core index']
  #allocation1 [shape = 'u32[144,128]{1,0:T(1,128)}', space=vmem, size = 0x12000, scoped, tag = 'internal scratch']
  #allocation2 [shape = 'f32[200,8]{1,0:T(8,128)}', space=vmem, size = 0x19000, scoped, tag = 'scratch operand']
  #allocation3 [shape = 's32[1]{0}', space=sflag, size = 0x4, scoped, tag = 'scoped memory for tpu_custom_call.1']
  #allocation4 [shape = 's32[1]{0:T(128)S(6)}', space=smem, size = 0x200, scoped, tag = 'prefetched SMEM operand 0']
  %s0 = inlined_call_operand.<no memory space> [shape: s32[1], index: 0, kind: input, shape index: {}]
  %s1 = inlined_call_operand.hbm [shape: f32[200,128], index: 1, kind: input, shape index: {}]
  %s2 = inlined_call_operand.vmem [shape: f32[128,8], index: 2, kind: input, shape index: {}]
  %s3 = inlined_call_operand.vmem [shape: f32[1,8], index: 3, kind: input, shape index: {}]
  %s4 = inlined_call_operand.vmem [shape: f32[200,8], index: 4, kind: output, shape index: {}]
  %s5 = sld [smem:[#allocation0]]
  $region34: #{tpu_custom_call.1} parent=0
    _
  %s7 = ssub.s32 1, %s5
  %s8 = scalar_select 0, %s7, %s5
  %9 = sst [smem:[#allocation4]] %s0
  $region1: #{tpu_custom_call.1} parent=0
    #allocation5 [shape = 'u8[102400]{0}', space=vmem, size = 0x19000, scoped, tag = 'input window, operand 1, single buffered']
    #allocation6 [shape = 's32[1]{0}', space=sflag, size = 0x4, scoped, tag = 'scoped memory for tpu_custom_call.1']
    %10 = vsyncpa [#allocation6], 0
    // Predicated region
    $region2: #{tpu_custom_call.1} parent=1 // pred_check
      _
    $region3: #{tpu_custom_call.1} parent=1 // pred_check_branch
      %12 = sbr.rel (0) target = $region5
    $region4: #{tpu_custom_call.1} parent=1 // pred_region
      %s14 = ssub.s32 3200, 3200
      %15 = vsyncadd [#allocation6], %s14
      %s16 = sshll.u32 [#allocation5], 4
      %s17 = int_to_ptr.vmem [resolvable:$true] %s16
      %22 = dma.hbm_to_vmem [thread:$0]  %s1, 3200, %s17, [#allocation6], 128, 128, 8
    $region5: #{tpu_custom_call.1} parent=1 // pred_fallthru
      _
    // Predicated region
    $region6: #{tpu_custom_call.1} parent=1 // pred_check
      _
    $region7: #{tpu_custom_call.1} parent=1 // pred_check_branch
      %24 = sbr.rel (0) target = $region9
    $region8: #{tpu_custom_call.1} parent=1 // pred_region
      _
    $region9: #{tpu_custom_call.1} parent=1 // pred_fallthru
      _
    // Predicated region
    $region10: #{tpu_custom_call.1} parent=1 // pred_check
      _
    $region11: #{tpu_custom_call.1} parent=1 // pred_check_branch
      %26 = sbr.rel (0) target = $region13
    $region12: #{tpu_custom_call.1} parent=1 // pred_region
      _
    $region13: #{tpu_custom_call.1} parent=1 // pred_fallthru
      _
    // Predicated region
    $region14: #{tpu_custom_call.1} parent=1 // pred_check
      _
    $region15: #{tpu_custom_call.1} parent=1 // pred_check_branch
      %28 = sbr.rel (0) target = $region17
    $region16: #{tpu_custom_call.1} parent=1 // pred_region
      %29 = dma.done [#allocation6], 3200
    $region17: #{tpu_custom_call.1} parent=1 // pred_fallthru
      _
    %p30 = scmp.eq.s32.totalorder 0, 0
    // Predicated region
    $region18: #{tpu_custom_call.1} parent=1 // pred_check
      %p31 = pneg %p30
    $region19: #{tpu_custom_call.1} parent=1 // pred_check_branch
      %33 = sbr.rel (%p31) target = $region21
    $region20: #{tpu_custom_call.1} parent=1 // pred_region
      %vm34 = vcmask 64512
      %35 = vst.msk [vmem:[#allocation2] sm:$0xff] %vm34, 0.0
      %36 = vst.msk [vmem:[#allocation2 + $0x8] sm:$0xff] %vm34, 0.0
      %37 = vst.msk [vmem:[#allocation2 + $0x10] sm:$0xff] %vm34, 0.0
      %38 = vst.msk [vmem:[#allocation2 + $0x18] sm:$0xff] %vm34, 0.0
      %39 = vst.msk [vmem:[#allocation2 + $0x20] sm:$0xff] %vm34, 0.0
      %40 = vst.msk [vmem:[#allocation2 + $0x28] sm:$0xff] %vm34, 0.0
      %41 = vst.msk [vmem:[#allocation2 + $0x30] sm:$0xff] %vm34, 0.0
      %42 = vst.msk [vmem:[#allocation2 + $0x38] sm:$0xff] %vm34, 0.0
      %43 = vst.msk [vmem:[#allocation2 + $0x40] sm:$0xff] %vm34, 0.0
      %44 = vst.msk [vmem:[#allocation2 + $0x48] sm:$0xff] %vm34, 0.0
      %45 = vst.msk [vmem:[#allocation2 + $0x50] sm:$0xff] %vm34, 0.0
      %46 = vst.msk [vmem:[#allocation2 + $0x58] sm:$0xff] %vm34, 0.0
      %47 = vst.msk [vmem:[#allocation2 + $0x60] sm:$0xff] %vm34, 0.0
      %48 = vst.msk [vmem:[#allocation2 + $0x68] sm:$0xff] %vm34, 0.0
      %49 = vst.msk [vmem:[#allocation2 + $0x70] sm:$0xff] %vm34, 0.0
      %50 = vst.msk [vmem:[#allocation2 + $0x78] sm:$0xff] %vm34, 0.0
      %51 = vst.msk [vmem:[#allocation2 + $0x80] sm:$0xff] %vm34, 0.0
      %52 = vst.msk [vmem:[#allocation2 + $0x88] sm:$0xff] %vm34, 0.0
      %53 = vst.msk [vmem:[#allocation2 + $0x90] sm:$0xff] %vm34, 0.0
      %54 = vst.msk [vmem:[#allocation2 + $0x98] sm:$0xff] %vm34, 0.0
      %55 = vst.msk [vmem:[#allocation2 + $0xa0] sm:$0xff] %vm34, 0.0
      %56 = vst.msk [vmem:[#allocation2 + $0xa8] sm:$0xff] %vm34, 0.0
      %57 = vst.msk [vmem:[#allocation2 + $0xb0] sm:$0xff] %vm34, 0.0
      %58 = vst.msk [vmem:[#allocation2 + $0xb8] sm:$0xff] %vm34, 0.0
      %59 = vst.msk [vmem:[#allocation2 + $0xc0] sm:$0xff] %vm34, 0.0
    $region21: #{tpu_custom_call.1} parent=1 // pred_fallthru
      _
    %v60 = vld [vmem:[#allocation5] sm:$0xff]
    %v61 = vld [vmem:[#allocation5 + $0x8] sm:$0xff]
    %v62 = vld [vmem:[#allocation5 + $0x10] sm:$0xff]
    %v63 = vld [vmem:[#allocation5 + $0x18] sm:$0xff]
    %v64 = vld [vmem:[#allocation5 + $0x20] sm:$0xff]
    %v65 = vld [vmem:[#allocation5 + $0x28] sm:$0xff]
    %v66 = vld [vmem:[#allocation5 + $0x30] sm:$0xff]
    %v67 = vld [vmem:[#allocation5 + $0x38] sm:$0xff]
    %v68 = vld [vmem:[#allocation5 + $0x40] sm:$0xff]
    %v69 = vld [vmem:[#allocation5 + $0x48] sm:$0xff]
    %v70 = vld [vmem:[#allocation5 + $0x50] sm:$0xff]
    %v71 = vld [vmem:[#allocation5 + $0x58] sm:$0xff]
    %v72 = vld [vmem:[#allocation5 + $0x60] sm:$0xff]
    %v73 = vld [vmem:[#allocation5 + $0x68] sm:$0xff]
    %v74 = vld [vmem:[#allocation5 + $0x70] sm:$0xff]
    %v75 = vld [vmem:[#allocation5 + $0x78] sm:$0xff]
    %v76 = vld [vmem:[#allocation5 + $0x80] sm:$0xff]
    %v77 = vld [vmem:[#allocation5 + $0x88] sm:$0xff]
    %v78 = vld [vmem:[#allocation5 + $0x90] sm:$0xff]
    %v79 = vld [vmem:[#allocation5 + $0x98] sm:$0xff]
    %v80 = vld [vmem:[#allocation5 + $0xa0] sm:$0xff]
    %v81 = vld [vmem:[#allocation5 + $0xa8] sm:$0xff]
    %v82 = vld [vmem:[#allocation5 + $0xb0] sm:$0xff]
    %v83 = vld [vmem:[#allocation5 + $0xb8] sm:$0xff]
    %v84 = vld [vmem:[#allocation5 + $0xc0] sm:$0xff]
    %v85 = vld [vmem:[#allocation2] sm:$0xff]
    %v86 = vld [vmem:[#allocation2 + $0x8] sm:$0xff]
    %v87 = vld [vmem:[#allocation2 + $0x10] sm:$0xff]
    %v88 = vld [vmem:[#allocation2 + $0x18] sm:$0xff]
    %v89 = vld [vmem:[#allocation2 + $0x20] sm:$0xff]
    %v90 = vld [vmem:[#allocation2 + $0x28] sm:$0xff]
    %v91 = vld [vmem:[#allocation2 + $0x30] sm:$0xff]
    %v92 = vld [vmem:[#allocation2 + $0x38] sm:$0xff]
    %v93 = vld [vmem:[#allocation2 + $0x40] sm:$0xff]
    %v94 = vld [vmem:[#allocation2 + $0x48] sm:$0xff]
    %v95 = vld [vmem:[#allocation2 + $0x50] sm:$0xff]
    %v96 = vld [vmem:[#allocation2 + $0x58] sm:$0xff]
    %v97 = vld [vmem:[#allocation2 + $0x60] sm:$0xff]
    %v98 = vld [vmem:[#allocation2 + $0x68] sm:$0xff]
    %v99 = vld [vmem:[#allocation2 + $0x70] sm:$0xff]
    %v100 = vld [vmem:[#allocation2 + $0x78] sm:$0xff]
    %v101 = vld [vmem:[#allocation2 + $0x80] sm:$0xff]
    %v102 = vld [vmem:[#allocation2 + $0x88] sm:$0xff]
    %v103 = vld [vmem:[#allocation2 + $0x90] sm:$0xff]
    %v104 = vld [vmem:[#allocation2 + $0x98] sm:$0xff]
    %v105 = vld [vmem:[#allocation2 + $0xa0] sm:$0xff]
    %v106 = vld [vmem:[#allocation2 + $0xa8] sm:$0xff]
    %v107 = vld [vmem:[#allocation2 + $0xb0] sm:$0xff]
    %v108 = vld [vmem:[#allocation2 + $0xb8] sm:$0xff]
    %v109 = vld [vmem:[#allocation2 + $0xc0] sm:$0xff]
    %v110 = vld [vmem:[%s2] sm:$0xff]
    %v111 = vld [vmem:[%s2 + $0x8] sm:$0xff]
    %v112 = vld [vmem:[%s2 + $0x10] sm:$0xff]
    %v113 = vld [vmem:[%s2 + $0x18] sm:$0xff]
    %v114 = vld [vmem:[%s2 + $0x20] sm:$0xff]
    %v115 = vld [vmem:[%s2 + $0x28] sm:$0xff]
    %v116 = vld [vmem:[%s2 + $0x30] sm:$0xff]
    %v117 = vld [vmem:[%s2 + $0x38] sm:$0xff]
    %v118 = vld [vmem:[%s2 + $0x40] sm:$0xff]
    %v119 = vld [vmem:[%s2 + $0x48] sm:$0xff]
    %v120 = vld [vmem:[%s2 + $0x50] sm:$0xff]
    %v121 = vld [vmem:[%s2 + $0x58] sm:$0xff]
    %v122 = vld [vmem:[%s2 + $0x60] sm:$0xff]
    %v123 = vld [vmem:[%s2 + $0x68] sm:$0xff]
    %v124 = vld [vmem:[%s2 + $0x70] sm:$0xff]
    %v125 = vld [vmem:[%s2 + $0x78] sm:$0xff]
    %126 = vmatprep.subr.mxu0 0.0
    %127 = vmatpush1.msra.mxu0 %v125
    %128 = vmatprep.subr.mxu0 0.0
    %129 = vmatpush1.msra.mxu0 %v124
    %130 = vmatprep.subr.mxu0 0.0
    %131 = vmatpush1.msra.mxu0 %v123
    %132 = vmatprep.subr.mxu0 0.0
    %133 = vmatpush1.msra.mxu0 %v122
    %134 = vmatprep.subr.mxu0 0.0
    %135 = vmatpush1.msra.mxu0 %v121
    %136 = vmatprep.subr.mxu0 0.0
    %137 = vmatpush1.msra.mxu0 %v120
    %138 = vmatprep.subr.mxu0 0.0
    %139 = vmatpush1.msra.mxu0 %v119
    %140 = vmatprep.subr.mxu0 0.0
    %141 = vmatpush1.msra.mxu0 %v118
    %142 = vmatprep.subr.mxu0 0.0
    %143 = vmatpush1.msra.mxu0 %v117
    %144 = vmatprep.subr.mxu0 0.0
    %145 = vmatpush1.msra.mxu0 %v116
    %146 = vmatprep.subr.mxu0 0.0
    %147 = vmatpush1.msra.mxu0 %v115
    %148 = vmatprep.subr.mxu0 0.0
    %149 = vmatpush1.msra.mxu0 %v114
    %150 = vmatprep.subr.mxu0 0.0
    %151 = vmatpush1.msra.mxu0 %v113
    %152 = vmatprep.subr.mxu0 0.0
    %153 = vmatpush1.msra.mxu0 %v112
    %154 = vmatprep.subr.mxu0 0.0
    %155 = vmatpush1.msra.mxu0 %v111
    %156 = vmatprep.subr.mxu0 0.0
    %157 = vmatpush1.msra.mxu0 %v110
    %158 = vmatprep.subr.mxu0 0.0
    %159 = vmatpush2.msra.mxu0 0.0
    %160 = vmatprep.subr.mxu0 0.0
    %161 = vmatpush2.msra.mxu0 0.0
    %162 = vmatprep.subr.mxu0 0.0
    %163 = vmatpush2.msra.mxu0 0.0
    %164 = vmatprep.subr.mxu0 0.0
    %165 = vmatpush2.msra.mxu0 0.0
    %166 = vmatprep.subr.mxu0 0.0
    %167 = vmatpush2.msra.mxu0 0.0
    %168 = vmatprep.subr.mxu0 0.0
    %169 = vmatpush2.msra.mxu0 0.0
    %170 = vmatprep.subr.mxu0 0.0
    %171 = vmatpush2.msra.mxu0 0.0
    %172 = vmatprep.subr.mxu0 0.0
    %173 = vmatpush2.msra.mxu0 0.0
    %174 = vmatprep.subr.mxu0 0.0
    %175 = vmatpush2.msra.mxu0 0.0
    %176 = vmatprep.subr.mxu0 0.0
    %177 = vmatpush2.msra.mxu0 0.0
    %178 = vmatprep.subr.mxu0 0.0
    %179 = vmatpush2.msra.mxu0 0.0
    %180 = vmatprep.subr.mxu0 0.0
    %181 = vmatpush2.msra.mxu0 0.0
    %182 = vmatprep.subr.mxu0 0.0
    %183 = vmatpush2.msra.mxu0 0.0
    %184 = vmatprep.subr.mxu0 0.0
    %185 = vmatpush2.msra.mxu0 0.0
    %186 = vmatprep.subr.mxu0 0.0
    %187 = vmatpush2.msra.mxu0 0.0
    %188 = vmatprep.subr.mxu0 0.0
    %189 = vmatpush2.msra.mxu0 0.0
    %190 = vmatprep.mubr.f32.mxu0 0.0
    %191 = vmatmul.mubr.f32.gmra.mxu0 %v60
    %v192 = vpop.f32.mrf.mxu0
    %v193 = vadd.f32 0.0, %v192
    %v194 = vpop.f32.mrf.mxu0
    %195 = vmatprep.mubr.f32.mxu0 0.0
    %196 = vmatmul.mubr.f32.gmra.mxu0 %v61
    %v197 = vpop.f32.mrf.mxu0
    %v198 = vadd.f32 0.0, %v197
    %v199 = vpop.f32.mrf.mxu0
    %200 = vmatprep.mubr.f32.mxu0 0.0
    %201 = vmatmul.mubr.f32.gmra.mxu0 %v62
    %v202 = vpop.f32.mrf.mxu0
    %v203 = vadd.f32 0.0, %v202
    %v204 = vpop.f32.mrf.mxu0
    %205 = vmatprep.mubr.f32.mxu0 0.0
    %206 = vmatmul.mubr.f32.gmra.mxu0 %v63
    %v207 = vpop.f32.mrf.mxu0
    %v208 = vadd.f32 0.0, %v207
    %v209 = vpop.f32.mrf.mxu0
    %210 = vmatprep.mubr.f32.mxu0 0.0
    %211 = vmatmul.mubr.f32.gmra.mxu0 %v64
    %v212 = vpop.f32.mrf.mxu0
    %v213 = vadd.f32 0.0, %v212
    %v214 = vpop.f32.mrf.mxu0
    %215 = vmatprep.mubr.f32.mxu0 0.0
    %216 = vmatmul.mubr.f32.gmra.mxu0 %v65
    %v217 = vpop.f32.mrf.mxu0
    %v218 = vadd.f32 0.0, %v217
    %v219 = vpop.f32.mrf.mxu0
    %220 = vmatprep.mubr.f32.mxu0 0.0
    %221 = vmatmul.mubr.f32.gmra.mxu0 %v66
    %v222 = vpop.f32.mrf.mxu0
    %v223 = vadd.f32 0.0, %v222
    %v224 = vpop.f32.mrf.mxu0
    %225 = vmatprep.mubr.f32.mxu0 0.0
    %226 = vmatmul.mubr.f32.gmra.mxu0 %v67
    %v227 = vpop.f32.mrf.mxu0
    %v228 = vadd.f32 0.0, %v227
    %v229 = vpop.f32.mrf.mxu0
    %230 = vmatprep.mubr.f32.mxu0 0.0
    %231 = vmatmul.mubr.f32.gmra.mxu0 %v68
    %v232 = vpop.f32.mrf.mxu0
    %v233 = vadd.f32 0.0, %v232
    %v234 = vpop.f32.mrf.mxu0
    %235 = vmatprep.mubr.f32.mxu0 0.0
    %236 = vmatmul.mubr.f32.gmra.mxu0 %v69
    %v237 = vpop.f32.mrf.mxu0
    %v238 = vadd.f32 0.0, %v237
    %v239 = vpop.f32.mrf.mxu0
    %240 = vmatprep.mubr.f32.mxu0 0.0
    %241 = vmatmul.mubr.f32.gmra.mxu0 %v70
    %v242 = vpop.f32.mrf.mxu0
    %v243 = vadd.f32 0.0, %v242
    %v244 = vpop.f32.mrf.mxu0
    %245 = vmatprep.mubr.f32.mxu0 0.0
    %246 = vmatmul.mubr.f32.gmra.mxu0 %v71
    %v247 = vpop.f32.mrf.mxu0
    %v248 = vadd.f32 0.0, %v247
    %v249 = vpop.f32.mrf.mxu0
    %250 = vmatprep.mubr.f32.mxu0 0.0
    %251 = vmatmul.mubr.f32.gmra.mxu0 %v72
    %v252 = vpop.f32.mrf.mxu0
    %v253 = vadd.f32 0.0, %v252
    %v254 = vpop.f32.mrf.mxu0
    %255 = vmatprep.mubr.f32.mxu0 0.0
    %256 = vmatmul.mubr.f32.gmra.mxu0 %v73
    %v257 = vpop.f32.mrf.mxu0
    %v258 = vadd.f32 0.0, %v257
    %v259 = vpop.f32.mrf.mxu0
    %260 = vmatprep.mubr.f32.mxu0 0.0
    %261 = vmatmul.mubr.f32.gmra.mxu0 %v74
    %v262 = vpop.f32.mrf.mxu0
    %v263 = vadd.f32 0.0, %v262
    %v264 = vpop.f32.mrf.mxu0
    %265 = vmatprep.mubr.f32.mxu0 0.0
    %266 = vmatmul.mubr.f32.gmra.mxu0 %v75
    %v267 = vpop.f32.mrf.mxu0
    %v268 = vadd.f32 0.0, %v267
    %v269 = vpop.f32.mrf.mxu0
    %270 = vmatprep.mubr.f32.mxu0 0.0
    %271 = vmatmul.mubr.f32.gmra.mxu0 %v76
    %v272 = vpop.f32.mrf.mxu0
    %v273 = vadd.f32 0.0, %v272
    %v274 = vpop.f32.mrf.mxu0
    %275 = vmatprep.mubr.f32.mxu0 0.0
    %276 = vmatmul.mubr.f32.gmra.mxu0 %v77
    %v277 = vpop.f32.mrf.mxu0
    %v278 = vadd.f32 0.0, %v277
    %v279 = vpop.f32.mrf.mxu0
    %280 = vmatprep.mubr.f32.mxu0 0.0
    %281 = vmatmul.mubr.f32.gmra.mxu0 %v78
    %v282 = vpop.f32.mrf.mxu0
    %v283 = vadd.f32 0.0, %v282
    %v284 = vpop.f32.mrf.mxu0
    %285 = vmatprep.mubr.f32.mxu0 0.0
    %286 = vmatmul.mubr.f32.gmra.mxu0 %v79
    %v287 = vpop.f32.mrf.mxu0
    %v288 = vadd.f32 0.0, %v287
    %v289 = vpop.f32.mrf.mxu0
    %290 = vmatprep.mubr.f32.mxu0 0.0
    %291 = vmatmul.mubr.f32.gmra.mxu0 %v80
    %v292 = vpop.f32.mrf.mxu0
    %v293 = vadd.f32 0.0, %v292
    %v294 = vpop.f32.mrf.mxu0
    %295 = vmatprep.mubr.f32.mxu0 0.0
    %296 = vmatmul.mubr.f32.gmra.mxu0 %v81
    %v297 = vpop.f32.mrf.mxu0
    %v298 = vadd.f32 0.0, %v297
    %v299 = vpop.f32.mrf.mxu0
    %300 = vmatprep.mubr.f32.mxu0 0.0
    %301 = vmatmul.mubr.f32.gmra.mxu0 %v82
    %v302 = vpop.f32.mrf.mxu0
    %v303 = vadd.f32 0.0, %v302
    %v304 = vpop.f32.mrf.mxu0
    %305 = vmatprep.mubr.f32.mxu0 0.0
    %306 = vmatmul.mubr.f32.gmra.mxu0 %v83
    %v307 = vpop.f32.mrf.mxu0
    %v308 = vadd.f32 0.0, %v307
    %v309 = vpop.f32.mrf.mxu0
    %310 = vmatprep.mubr.f32.mxu0 0.0
    %311 = vmatmul.mubr.f32.gmra.mxu0 %v84
    %v312 = vpop.f32.mrf.mxu0
    %v313 = vadd.f32 0.0, %v312
    %v314 = vpop.f32.mrf.mxu0
    %315 = vdwg.mxu0
    %v316 = vadd.f32 %v85, %v193
    %v317 = vadd.f32 %v86, %v198
    %v318 = vadd.f32 %v87, %v203
    %v319 = vadd.f32 %v88, %v208
    %v320 = vadd.f32 %v89, %v213
    %v321 = vadd.f32 %v90, %v218
    %v322 = vadd.f32 %v91, %v223
    %v323 = vadd.f32 %v92, %v228
    %v324 = vadd.f32 %v93, %v233
    %v325 = vadd.f32 %v94, %v238
    %v326 = vadd.f32 %v95, %v243
    %v327 = vadd.f32 %v96, %v248
    %v328 = vadd.f32 %v97, %v253
    %v329 = vadd.f32 %v98, %v258
    %v330 = vadd.f32 %v99, %v263
    %v331 = vadd.f32 %v100, %v268
    %v332 = vadd.f32 %v101, %v273
    %v333 = vadd.f32 %v102, %v278
    %v334 = vadd.f32 %v103, %v283
    %v335 = vadd.f32 %v104, %v288
    %v336 = vadd.f32 %v105, %v293
    %v337 = vadd.f32 %v106, %v298
    %v338 = vadd.f32 %v107, %v303
    %v339 = vadd.f32 %v108, %v308
    %v340 = vadd.f32 %v109, %v313
    %vm341 = vcmask 64512
    %342 = vst.msk [vmem:[#allocation2] sm:$0xff] %vm341, %v316
    %343 = vst.msk [vmem:[#allocation2 + $0x8] sm:$0xff] %vm341, %v317
    %344 = vst.msk [vmem:[#allocation2 + $0x10] sm:$0xff] %vm341, %v318
    %345 = vst.msk [vmem:[#allocation2 + $0x18] sm:$0xff] %vm341, %v319
    %346 = vst.msk [vmem:[#allocation2 + $0x20] sm:$0xff] %vm341, %v320
    %347 = vst.msk [vmem:[#allocation2 + $0x28] sm:$0xff] %vm341, %v321
    %348 = vst.msk [vmem:[#allocation2 + $0x30] sm:$0xff] %vm341, %v322
    %349 = vst.msk [vmem:[#allocation2 + $0x38] sm:$0xff] %vm341, %v323
    %350 = vst.msk [vmem:[#allocation2 + $0x40] sm:$0xff] %vm341, %v324
    %351 = vst.msk [vmem:[#allocation2 + $0x48] sm:$0xff] %vm341, %v325
    %352 = vst.msk [vmem:[#allocation2 + $0x50] sm:$0xff] %vm341, %v326
    %353 = vst.msk [vmem:[#allocation2 + $0x58] sm:$0xff] %vm341, %v327
    %354 = vst.msk [vmem:[#allocation2 + $0x60] sm:$0xff] %vm341, %v328
    %355 = vst.msk [vmem:[#allocation2 + $0x68] sm:$0xff] %vm341, %v329
    %356 = vst.msk [vmem:[#allocation2 + $0x70] sm:$0xff] %vm341, %v330
    %357 = vst.msk [vmem:[#allocation2 + $0x78] sm:$0xff] %vm341, %v331
    %358 = vst.msk [vmem:[#allocation2 + $0x80] sm:$0xff] %vm341, %v332
    %359 = vst.msk [vmem:[#allocation2 + $0x88] sm:$0xff] %vm341, %v333
    %360 = vst.msk [vmem:[#allocation2 + $0x90] sm:$0xff] %vm341, %v334
    %361 = vst.msk [vmem:[#allocation2 + $0x98] sm:$0xff] %vm341, %v335
    %362 = vst.msk [vmem:[#allocation2 + $0xa0] sm:$0xff] %vm341, %v336
    %363 = vst.msk [vmem:[#allocation2 + $0xa8] sm:$0xff] %vm341, %v337
    %364 = vst.msk [vmem:[#allocation2 + $0xb0] sm:$0xff] %vm341, %v338
    %365 = vst.msk [vmem:[#allocation2 + $0xb8] sm:$0xff] %vm341, %v339
    %366 = vst.msk [vmem:[#allocation2 + $0xc0] sm:$0xff] %vm341, %v340
    // Predicated region
    $region22: #{tpu_custom_call.1} parent=1 // pred_check
      %p367 = pneg %p30
    $region23: #{tpu_custom_call.1} parent=1 // pred_check_branch
      %369 = sbr.rel (%p367) target = $region25
    $region24: #{tpu_custom_call.1} parent=1 // pred_region
      %v370 = vld [vmem:[#allocation2] sm:$0xff]
      %v371 = vld [vmem:[#allocation2 + $0x8] sm:$0xff]
      %v372 = vld [vmem:[#allocation2 + $0x10] sm:$0xff]
      %v373 = vld [vmem:[#allocation2 + $0x18] sm:$0xff]
      %v374 = vld [vmem:[#allocation2 + $0x20] sm:$0xff]
      %v375 = vld [vmem:[#allocation2 + $0x28] sm:$0xff]
      %v376 = vld [vmem:[#allocation2 + $0x30] sm:$0xff]
      %v377 = vld [vmem:[#allocation2 + $0x38] sm:$0xff]
      %v378 = vld [vmem:[#allocation2 + $0x40] sm:$0xff]
      %v379 = vld [vmem:[#allocation2 + $0x48] sm:$0xff]
      %v380 = vld [vmem:[#allocation2 + $0x50] sm:$0xff]
      %v381 = vld [vmem:[#allocation2 + $0x58] sm:$0xff]
      %v382 = vld [vmem:[#allocation2 + $0x60] sm:$0xff]
      %v383 = vld [vmem:[#allocation2 + $0x68] sm:$0xff]
      %v384 = vld [vmem:[#allocation2 + $0x70] sm:$0xff]
      %v385 = vld [vmem:[#allocation2 + $0x78] sm:$0xff]
      %v386 = vld [vmem:[#allocation2 + $0x80] sm:$0xff]
      %v387 = vld [vmem:[#allocation2 + $0x88] sm:$0xff]
      %v388 = vld [vmem:[#allocation2 + $0x90] sm:$0xff]
      %v389 = vld [vmem:[#allocation2 + $0x98] sm:$0xff]
      %v390 = vld [vmem:[#allocation2 + $0xa0] sm:$0xff]
      %v391 = vld [vmem:[#allocation2 + $0xa8] sm:$0xff]
      %v392 = vld [vmem:[#allocation2 + $0xb0] sm:$0xff]
      %v393 = vld [vmem:[#allocation2 + $0xb8] sm:$0xff]
      %v394 = vld [vmem:[#allocation2 + $0xc0] sm:$0xff]
      %v395 = vld [vmem:[%s3] sm:$0x1]
      %v397 = vlaneseq
      %v398 = vshrl.u32 %v397, 7
      %v399 = vsub.s32 0, %v398
      %v400 = vrot.slane %v395, %v399
      %v402 = vadd.f32 %v370, %v400
      %v403 = vadd.f32 %v371, %v400
      %v404 = vadd.f32 %v372, %v400
      %v405 = vadd.f32 %v373, %v400
      %v406 = vadd.f32 %v374, %v400
      %v407 = vadd.f32 %v375, %v400
      %v408 = vadd.f32 %v376, %v400
      %v409 = vadd.f32 %v377, %v400
      %v410 = vadd.f32 %v378, %v400
      %v411 = vadd.f32 %v379, %v400
      %v412 = vadd.f32 %v380, %v400
      %v413 = vadd.f32 %v381, %v400
      %v414 = vadd.f32 %v382, %v400
      %v415 = vadd.f32 %v383, %v400
      %v416 = vadd.f32 %v384, %v400
      %v417 = vadd.f32 %v385, %v400
      %v418 = vadd.f32 %v386, %v400
      %v419 = vadd.f32 %v387, %v400
      %v420 = vadd.f32 %v388, %v400
      %v421 = vadd.f32 %v389, %v400
      %v422 = vadd.f32 %v390, %v400
      %v423 = vadd.f32 %v391, %v400
      %v424 = vadd.f32 %v392, %v400
      %v425 = vadd.f32 %v393, %v400
      %v426 = vadd.f32 %v394, %v400
      %427 = vst.msk [vmem:[%s4] sm:$0xff] %vm341, %v402
      %428 = vst.msk [vmem:[%s4 + $0x8] sm:$0xff] %vm341, %v403
      %429 = vst.msk [vmem:[%s4 + $0x10] sm:$0xff] %vm341, %v404
      %430 = vst.msk [vmem:[%s4 + $0x18] sm:$0xff] %vm341, %v405
      %431 = vst.msk [vmem:[%s4 + $0x20] sm:$0xff] %vm341, %v406
      %432 = vst.msk [vmem:[%s4 + $0x28] sm:$0xff] %vm341, %v407
      %433 = vst.msk [vmem:[%s4 + $0x30] sm:$0xff] %vm341, %v408
      %434 = vst.msk [vmem:[%s4 + $0x38] sm:$0xff] %vm341, %v409
      %435 = vst.msk [vmem:[%s4 + $0x40] sm:$0xff] %vm341, %v410
      %436 = vst.msk [vmem:[%s4 + $0x48] sm:$0xff] %vm341, %v411
      %437 = vst.msk [vmem:[%s4 + $0x50] sm:$0xff] %vm341, %v412
      %438 = vst.msk [vmem:[%s4 + $0x58] sm:$0xff] %vm341, %v413
      %439 = vst.msk [vmem:[%s4 + $0x60] sm:$0xff] %vm341, %v414
      %440 = vst.msk [vmem:[%s4 + $0x68] sm:$0xff] %vm341, %v415
      %441 = vst.msk [vmem:[%s4 + $0x70] sm:$0xff] %vm341, %v416
      %442 = vst.msk [vmem:[%s4 + $0x78] sm:$0xff] %vm341, %v417
      %443 = vst.msk [vmem:[%s4 + $0x80] sm:$0xff] %vm341, %v418
      %444 = vst.msk [vmem:[%s4 + $0x88] sm:$0xff] %vm341, %v419
      %445 = vst.msk [vmem:[%s4 + $0x90] sm:$0xff] %vm341, %v420
      %446 = vst.msk [vmem:[%s4 + $0x98] sm:$0xff] %vm341, %v421
      %447 = vst.msk [vmem:[%s4 + $0xa0] sm:$0xff] %vm341, %v422
      %448 = vst.msk [vmem:[%s4 + $0xa8] sm:$0xff] %vm341, %v423
      %449 = vst.msk [vmem:[%s4 + $0xb0] sm:$0xff] %vm341, %v424
      %450 = vst.msk [vmem:[%s4 + $0xb8] sm:$0xff] %vm341, %v425
      %451 = vst.msk [vmem:[%s4 + $0xc0] sm:$0xff] %vm341, %v426
    $region25: #{tpu_custom_call.1} parent=1 // pred_fallthru
      _
    // Predicated region
    $region26: #{tpu_custom_call.1} parent=1 // pred_check
      _
    $region27: #{tpu_custom_call.1} parent=1 // pred_check_branch
      %453 = sbr.rel (0) target = $region29
    $region28: #{tpu_custom_call.1} parent=1 // pred_region
      _
    $region29: #{tpu_custom_call.1} parent=1 // pred_fallthru
      _
    // Predicated region
    $region30: #{tpu_custom_call.1} parent=1 // pred_check
      _
    $region31: #{tpu_custom_call.1} parent=1 // pred_check_branch
      %455 = sbr.rel (0) target = $region33
    $region32: #{tpu_custom_call.1} parent=1 // pred_region
      _
    $region33: #{tpu_custom_call.1} parent=1 // pred_fallthru
      _
    %456 = vsyncpa [#allocation6], 1

</llo_original>
